<compile_context>
chip_gen: v6e
topology: v6e:2x2x1
jax: 0.10.0
libtpu: 0.0.40
codegen_flags: <defaults>
</compile_context>

<pallas_src>
import jax
import jax.numpy as jnp
from jax.experimental import pallas as pl
from jax.experimental.pallas import tpu as pltpu


def residual_block_kernel(x_ref, w1_ref, b1_ref, w2_ref, b2_ref, o_ref):
    # Linear 1 + ReLU: (TB, U) @ (U, 256) -> (TB, 256).  bf16 MXU, f32 acc.
    h = jnp.dot(x_ref[...], w1_ref[...], preferred_element_type=jnp.float32)
    h = jnp.maximum(h + b1_ref[...], 0.0)            # bias (1, 256) broadcast
    # Linear 2: (TB, 256) @ (256, U) -> (TB, U).
    y = jnp.dot(h.astype(jnp.bfloat16), w2_ref[...],
                preferred_element_type=jnp.float32)
    y = y + b2_ref[...]                              # bias (1, U) broadcast
    # Residual add + ReLU.  Re-read the residual from VMEM (keeps the x tile
    # from staying live across both MXU calls -> no spills at big tiles).
    o_ref[...] = jnp.maximum(x_ref[...].astype(jnp.float32) + y,
                             0.0).astype(o_ref.dtype)


def _round_up(v, m):
    return ((v + m - 1) // m) * m


def _choose_batch_tile(b8, batch_tile):
    """Pick a batch-tile size (multiple of 8, <= batch_tile).

    Prefers large tiles (mem-bound kernels approach the HBM roofline at
    512-1024 rows), avoids padding the batch up to a tile boundary (wasted
    HBM traffic), and for large batches caps the tile so the 1-D grid has
    >= 4 steps (lets v7x's two TensorCores split the work) without dropping
    below the ~512-row efficiency plateau.
    """
    cap = max(8, min(batch_tile, b8))
    if b8 // 4 >= 512:                       # "large" batch: ask for >=4 steps
        cap = min(cap, _round_up(b8 // 4, 8))
    best_tb, best_cost = 8, None
    for tb in range(8, cap + 1, 8):
        steps = -(-b8 // tb)
        cost = steps * tb + 16 * steps       # rows processed + per-step overhead
        if best_cost is None or cost <= best_cost:   # ties -> larger tile
            best_tb, best_cost = tb, cost
    return best_tb


def residual_block(x, w1, b1, w2, b2, *, batch_tile=1024):
    """x: (B, units); w1: (units, 256); b1: (256,); w2: (256, units); b2: (units,).

    Returns relu(x + relu(x @ w1 + b1) @ w2 + b2) in bfloat16.
    """
    B, units = x.shape
    hidden = w1.shape[1]

    # bf16 activations/weights for the MXU and for halved HBM I/O.
    x_bf = x.astype(jnp.bfloat16)
    w1_bf = w1.astype(jnp.bfloat16)
    w2_bf = w2.astype(jnp.bfloat16)
    b1_2d = b1.reshape(1, hidden).astype(jnp.float32)
    b2_2d = b2.reshape(1, units).astype(jnp.float32)

    # Batch tiling: pad the batch only to a multiple of 8 (sublane), then pick
    # the tile that minimizes padded work while keeping tiles large.
    b8 = _round_up(B, 8)
    tb = _choose_batch_tile(b8, batch_tile)
    b_pad = _round_up(b8, tb)
    if b_pad != B:
        x_bf = jnp.pad(x_bf, ((0, b_pad - B), (0, 0)))

    grid = (b_pad // tb,)

    # Honest advisory cost (unpadded feature dim, bf16 I/O).
    flops = 4 * b_pad * units * hidden                 # two matmuls
    bytes_accessed = (b_pad * units * 2                # x (bf16)
                      + units * hidden * 2             # W1 (bf16)
                      + hidden * units * 2             # W2 (bf16)
                      + hidden * 4 + units * 4         # biases (f32)
                      + b_pad * units * 2)             # out (bf16)

    out = pl.pallas_call(
        residual_block_kernel,
        out_shape=jax.ShapeDtypeStruct((b_pad, units), jnp.bfloat16),
        grid_spec=pltpu.PrefetchScalarGridSpec(
            num_scalar_prefetch=0,
            grid=grid,
            in_specs=[
                pl.BlockSpec((tb, units), lambda i: (i, 0)),       # x: batch-tiled
                pl.BlockSpec((units, hidden), lambda i: (0, 0)),   # W1: resident
                pl.BlockSpec((1, hidden), lambda i: (0, 0)),       # b1: resident
                pl.BlockSpec((hidden, units), lambda i: (0, 0)),   # W2: resident
                pl.BlockSpec((1, units), lambda i: (0, 0)),        # b2: resident
            ],
            out_specs=pl.BlockSpec((tb, units), lambda i: (i, 0)),
        ),
        compiler_params=pltpu.CompilerParams(
            # No reduction axis: batch blocks are independent -> parallel
            # (lets v7x shard grid steps across its two TensorCores).
            dimension_semantics=("parallel",),
        ),
        cost_estimate=pl.CostEstimate(
            flops=flops, transcendentals=0, bytes_accessed=bytes_accessed),
    )(x_bf, w1_bf, b1_2d, w2_bf, b2_2d)

    # Strip batch padding (padded rows hold relu(relu(b1)@W2 + b2), not zeros).
    if b_pad != B:
        out = out[:B]
    return out


def reference(x, w1, b1, w2, b2):
    h = jnp.maximum(x @ w1 + b1, 0.0)
    y = h @ w2 + b2
    return jnp.maximum(x + y, 0.0)


if __name__ == "__main__":
    key = jax.random.PRNGKey(0)
    B = 8          # batch
    UNITS = 32     # residual-block feature width
    HIDDEN = 256   # fixed inner width from the module (Linear(units, 256))

    k_x, k_w1, k_b1, k_w2, k_b2 = jax.random.split(key, 5)
    x = jax.random.normal(k_x, (B, UNITS), dtype=jnp.float32)
    # Deterministic synthetic parameters (PyTorch Linear stores (out, in);
    # here we directly build the transposed layout used by the kernel).
    w1 = jax.random.normal(k_w1, (UNITS, HIDDEN), dtype=jnp.float32) * 0.05
    b1 = jax.random.normal(k_b1, (HIDDEN,), dtype=jnp.float32) * 0.05
    w2 = jax.random.normal(k_w2, (HIDDEN, UNITS), dtype=jnp.float32) * 0.05
    b2 = jax.random.normal(k_b2, (UNITS,), dtype=jnp.float32) * 0.05

    out = residual_block(x, w1, b1, w2, b2)
    jax.block_until_ready(out)

    ref = reference(x, w1, b1, w2, b2)
    assert out.shape == (B, UNITS)
    # bf16 activations/weights/output (f32 accumulate & epilogue) vs f32 ref.
    assert jnp.allclose(out.astype(jnp.float32), ref, atol=2e-2, rtol=2e-2), (
        float(jnp.max(jnp.abs(out.astype(jnp.float32) - ref))))

    print("KERNEL_OK")
</pallas_src>

<mosaic_0001>
module attributes {stable_mosaic.version = 11 : i64} {
  func.func @residual_block_kernel(%arg0: i32, %arg1: memref<8x32xbf16, #tpu.memory_space<vmem>>, %arg2: memref<32x256xbf16, #tpu.memory_space<vmem>>, %arg3: memref<1x256xf32, #tpu.memory_space<vmem>>, %arg4: memref<256x32xbf16, #tpu.memory_space<vmem>>, %arg5: memref<1x32xf32, #tpu.memory_space<vmem>>, %arg6: memref<8x32xbf16, #tpu.memory_space<vmem>>) attributes {dimension_semantics = [#tpu.dimension_semantics<parallel>], iteration_bounds = array<i64: 1>, scalar_prefetch = 0 : i64, scratch_operands = 0 : i64, tpu.core_type = #tpu.core_type<tc>, window_params = [{transform_indices = @transform_0, window_bounds = array<i64: 8, 32>}, {pipeline_mode = #tpu.pipeline_mode<synchronous>, transform_indices = @transform_1, window_bounds = array<i64: 32, 256>}, {pipeline_mode = #tpu.pipeline_mode<synchronous>, transform_indices = @transform_2, window_bounds = array<i64: 1, 256>}, {pipeline_mode = #tpu.pipeline_mode<synchronous>, transform_indices = @transform_3, window_bounds = array<i64: 256, 32>}, {pipeline_mode = #tpu.pipeline_mode<synchronous>, transform_indices = @transform_4, window_bounds = array<i64: 1, 32>}, {transform_indices = @transform_5, window_bounds = array<i64: 8, 32>}]} {
    %c0 = arith.constant 0 : index
    %c0_0 = arith.constant 0 : index
    %0 = vector.load %arg1[%c0, %c0_0] : memref<8x32xbf16, #tpu.memory_space<vmem>>, vector<8x32xbf16>
    %c0_1 = arith.constant 0 : index
    %c0_2 = arith.constant 0 : index
    %1 = vector.load %arg2[%c0_1, %c0_2] : memref<32x256xbf16, #tpu.memory_space<vmem>>, vector<32x256xbf16>
    %cst = arith.constant dense<0.000000e+00> : vector<8x256xf32>
    %2 = tpu.matmul %0, %1, %cst {dimension_numbers = #tpu.dot_dimension_numbers<[1], [0], [0], [1], [0, 0, 1, 1], [], []>} : vector<8x32xbf16>, vector<32x256xbf16>, vector<8x256xf32> -> vector<8x256xf32>
    %c0_3 = arith.constant 0 : index
    %c0_4 = arith.constant 0 : index
    %3 = vector.load %arg3[%c0_3, %c0_4] : memref<1x256xf32, #tpu.memory_space<vmem>>, vector<1x256xf32>
    %4 = vector.broadcast %3 : vector<1x256xf32> to vector<8x256xf32>
    %5 = arith.addf %2, %4 : vector<8x256xf32>
    %cst_5 = arith.constant 0.000000e+00 : f32
    %6 = vector.broadcast %cst_5 : f32 to vector<8x256xf32>
    %7 = arith.maximumf %5, %6 : vector<8x256xf32>
    %8 = arith.truncf %7 : vector<8x256xf32> to vector<8x256xbf16>
    %c0_6 = arith.constant 0 : index
    %c0_7 = arith.constant 0 : index
    %9 = vector.load %arg4[%c0_6, %c0_7] : memref<256x32xbf16, #tpu.memory_space<vmem>>, vector<256x32xbf16>
    %cst_8 = arith.constant dense<0.000000e+00> : vector<8x32xf32>
    %10 = tpu.matmul %8, %9, %cst_8 {dimension_numbers = #tpu.dot_dimension_numbers<[1], [0], [0], [1], [0, 0, 1, 1], [], []>} : vector<8x256xbf16>, vector<256x32xbf16>, vector<8x32xf32> -> vector<8x32xf32>
    %c0_9 = arith.constant 0 : index
    %c0_10 = arith.constant 0 : index
    %11 = vector.load %arg5[%c0_9, %c0_10] : memref<1x32xf32, #tpu.memory_space<vmem>>, vector<1x32xf32>
    %12 = vector.broadcast %11 : vector<1x32xf32> to vector<8x32xf32>
    %13 = arith.addf %10, %12 : vector<8x32xf32>
    %c0_11 = arith.constant 0 : index
    %c0_12 = arith.constant 0 : index
    %14 = vector.load %arg1[%c0_11, %c0_12] : memref<8x32xbf16, #tpu.memory_space<vmem>>, vector<8x32xbf16>
    %15 = arith.extf %14 : vector<8x32xbf16> to vector<8x32xf32>
    %16 = arith.addf %15, %13 : vector<8x32xf32>
    %cst_13 = arith.constant 0.000000e+00 : f32
    %17 = vector.broadcast %cst_13 : f32 to vector<8x32xf32>
    %18 = arith.maximumf %16, %17 : vector<8x32xf32>
    %19 = arith.truncf %18 : vector<8x32xf32> to vector<8x32xbf16>
    %c0_14 = arith.constant 0 : index
    %c0_15 = arith.constant 0 : index
    %20 = vector.load %arg6[%c0_14, %c0_15] : memref<8x32xbf16, #tpu.memory_space<vmem>>, vector<8x32xbf16>
    tpu.vector_store %arg6[%c0_14, %c0_15], %19 {strides = array<i32>} : memref<8x32xbf16, #tpu.memory_space<vmem>>, vector<8x32xbf16>,
    return
  }
  func.func @transform_0(%arg0: i32) -> (i32, i32) {
    %c0_i32 = arith.constant 0 : i32
    %c0_i32_0 = arith.constant 0 : i32
    return %arg0, %c0_i32 : i32, i32
  }
  func.func @transform_1(%arg0: i32) -> (i32, i32) {
    %c0_i32 = arith.constant 0 : i32
    %c0_i32_0 = arith.constant 0 : i32
    %c0_i32_1 = arith.constant 0 : i32
    return %c0_i32, %c0_i32_0 : i32, i32
  }
  func.func @transform_2(%arg0: i32) -> (i32, i32) {
    %c0_i32 = arith.constant 0 : i32
    %c0_i32_0 = arith.constant 0 : i32
    %c0_i32_1 = arith.constant 0 : i32
    return %c0_i32, %c0_i32_0 : i32, i32
  }
  func.func @transform_3(%arg0: i32) -> (i32, i32) {
    %c0_i32 = arith.constant 0 : i32
    %c0_i32_0 = arith.constant 0 : i32
    %c0_i32_1 = arith.constant 0 : i32
    return %c0_i32, %c0_i32_0 : i32, i32
  }
  func.func @transform_4(%arg0: i32) -> (i32, i32) {
    %c0_i32 = arith.constant 0 : i32
    %c0_i32_0 = arith.constant 0 : i32
    %c0_i32_1 = arith.constant 0 : i32
    return %c0_i32, %c0_i32_0 : i32, i32
  }
  func.func @transform_5(%arg0: i32) -> (i32, i32) {
    %c0_i32 = arith.constant 0 : i32
    %c0_i32_0 = arith.constant 0 : i32
    return %arg0, %c0_i32 : i32, i32
  }
}

</mosaic_0001>

<llo_original>
// kernel: tpu_custom_call.1
$region0: #{tpu_custom_call.1}
  #allocation0 [shape = 'u32[]', space=smem, size = 0x4, offset = 0x4, fixed_abs, tag = 'smem constant byte address 0x4 - core index']
  #allocation1 [shape = 'u32[144,128]{1,0:T(1,128)}', space=vmem, size = 0x12000, scoped, tag = 'internal scratch']
  %s0 = inlined_call_operand.vmem [shape: bf16[8,32], index: 0, kind: input, shape index: {}]
  %s1 = inlined_call_operand.vmem [shape: bf16[32,256], index: 1, kind: input, shape index: {}]
  %s2 = inlined_call_operand.vmem [shape: f32[1,256], index: 2, kind: input, shape index: {}]
  %s3 = inlined_call_operand.vmem [shape: bf16[256,32], index: 3, kind: input, shape index: {}]
  %s4 = inlined_call_operand.vmem [shape: f32[1,32], index: 4, kind: input, shape index: {}]
  %s5 = inlined_call_operand.hbm [shape: bf16[8,32], index: 5, kind: output, shape index: {}]
  %s6 = sld [smem:[#allocation0]]
  $region30: #{tpu_custom_call.1} parent=0
    _
  %s8 = ssub.s32 1, %s6
  %s9 = scalar_select 0, %s8, %s6
  $region1: #{tpu_custom_call.1} parent=0
    #allocation2 [shape = 'u8[2048]{0}', space=vmem, size = 0x800, scoped, tag = 'output window, operand 0, single buffered']
    #allocation3 [shape = 's32[1]{0}', space=sflag, size = 0x4, scoped, tag = 'scoped memory for tpu_custom_call.1']
    %10 = vsyncpa [#allocation3], 0
    // Predicated region
    $region2: #{tpu_custom_call.1} parent=1 // pred_check
      _
    $region3: #{tpu_custom_call.1} parent=1 // pred_check_branch
      %12 = sbr.rel (0) target = $region5
    $region4: #{tpu_custom_call.1} parent=1 // pred_region
      _
    $region5: #{tpu_custom_call.1} parent=1 // pred_fallthru
      _
    // Predicated region
    $region6: #{tpu_custom_call.1} parent=1 // pred_check
      _
    $region7: #{tpu_custom_call.1} parent=1 // pred_check_branch
      %14 = sbr.rel (0) target = $region9
    $region8: #{tpu_custom_call.1} parent=1 // pred_region
      _
    $region9: #{tpu_custom_call.1} parent=1 // pred_fallthru
      _
    // Predicated region
    $region10: #{tpu_custom_call.1} parent=1 // pred_check
      _
    $region11: #{tpu_custom_call.1} parent=1 // pred_check_branch
      %16 = sbr.rel (0) target = $region13
    $region12: #{tpu_custom_call.1} parent=1 // pred_region
      _
    $region13: #{tpu_custom_call.1} parent=1 // pred_fallthru
      _
    // Predicated region
    $region14: #{tpu_custom_call.1} parent=1 // pred_check
      _
    $region15: #{tpu_custom_call.1} parent=1 // pred_check_branch
      %18 = sbr.rel (0) target = $region17
    $region16: #{tpu_custom_call.1} parent=1 // pred_region
      _
    $region17: #{tpu_custom_call.1} parent=1 // pred_fallthru
      _
    // Predicated region
    $region18: #{tpu_custom_call.1} parent=1 // pred_check
      _
    $region19: #{tpu_custom_call.1} parent=1 // pred_check_branch
      %20 = sbr.rel (0) target = $region21
    $region20: #{tpu_custom_call.1} parent=1 // pred_region
      _
    $region21: #{tpu_custom_call.1} parent=1 // pred_fallthru
      _
    %v22 = vld [vmem:[%s0] sm:$0xf]
    %v23 = vld [vmem:[%s1] sm:$0xff]
    %v24 = vld [vmem:[%s1 + $0x8] sm:$0xff]
    %v25 = vld [vmem:[%s1 + $0x10] sm:$0xff]
    %v26 = vld [vmem:[%s1 + $0x18] sm:$0xff]
    %v27 = vld [vmem:[%s2] sm:$0x3]
    %v29 = vlaneseq
    %v30 = vshrl.u32 %v29, 7
    %v31 = vsub.s32 0, %v30
    %v32 = vrot.slane %v27, %v31
    %v33 = vlaneseq
    %v34 = vshrl.u32 %v33, 7
    %v35 = vsub.s32 1, %v34
    %v36 = vrot.slane %v27, %v35
    %v43 = vunpack.c.l.b16 %v23
    %v44 = vunpack.c.h.b16 %v23
    %v45 = vunpack.c.l.b16 %v24
    %v46 = vunpack.c.h.b16 %v24
    %v47 = vunpack.c.l.b16 %v25
    %v48 = vunpack.c.h.b16 %v25
    %v49 = vunpack.c.l.b16 %v26
    %v50 = vunpack.c.h.b16 %v26
    %v51 = vpack.c.b16 %v45, %v43
    %v52 = vpack.c.b16 %v46, %v44
    %v53 = vpack.c.b16 %v49, %v47
    %v54 = vpack.c.b16 %v50, %v48
    %vm59 = vcmask 261120
    %v61 = vsel %vm59, %v22, 0
    %63 = vmatprep.subr.bf16.mxu0 0
    %64 = vmatpush1.bf16.msra.mxu0 0
    %65 = vmatprep.subr.bf16.mxu0 0
    %66 = vmatpush1.bf16.msra.mxu0 0
    %67 = vmatprep.subr.bf16.mxu0 0
    %68 = vmatpush1.bf16.msra.mxu0 0
    %69 = vmatprep.subr.bf16.mxu0 0
    %70 = vmatpush1.bf16.msra.mxu0 0
    %71 = vmatprep.subr.bf16.mxu0 0
    %72 = vmatpush1.bf16.msra.mxu0 0
    %73 = vmatprep.subr.bf16.mxu0 0
    %74 = vmatpush1.bf16.msra.mxu0 0
    %75 = vmatprep.subr.bf16.mxu0 %v54
    %76 = vmatpush1.bf16.msra.mxu0 %v53
    %77 = vmatprep.subr.bf16.mxu0 %v52
    %78 = vmatpush1.bf16.msra.mxu0 %v51
    %79 = vmatprep.subr.bf16.mxu0 0
    %80 = vmatpush2.bf16.msra.mxu0 0
    %81 = vmatprep.subr.bf16.mxu0 0
    %82 = vmatpush2.bf16.msra.mxu0 0
    %83 = vmatprep.subr.bf16.mxu0 0
    %84 = vmatpush2.bf16.msra.mxu0 0
    %85 = vmatprep.subr.bf16.mxu0 0
    %86 = vmatpush2.bf16.msra.mxu0 0
    %87 = vmatprep.subr.bf16.mxu0 0
    %88 = vmatpush2.bf16.msra.mxu0 0
    %89 = vmatprep.subr.bf16.mxu0 0
    %90 = vmatpush2.bf16.msra.mxu0 0
    %91 = vmatprep.subr.bf16.mxu0 0
    %92 = vmatpush2.bf16.msra.mxu0 0
    %93 = vmatprep.subr.bf16.mxu0 0
    %94 = vmatpush2.bf16.msra.mxu0 0
    %95 = vmatprep.mubr.bf16.mxu0 0
    %96 = vmatmul.mubr.bf16.gmra.mxu0 %v61
    %v97 = vpop.f32.mrf.mxu0
    %v98 = vadd.f32 %v32, %v97
    %v99 = vpop.f32.mrf.mxu0
    %v100 = vadd.f32 %v36, %v99
    %v101 = vpop.f32.mrf.mxu0
    %v102 = vpop.f32.mrf.mxu0
    %103 = vdwg.mxu0
    %v104 = vmax.f32 %v98, 0.0
    %v105 = vmax.f32 %v100, 0.0
    %v106 = vpack.c.bf16 %v104, %v104
    %v107 = vpack.c.bf16 %v105, %v105
    %v108 = vld [vmem:[%s3] sm:$0xf]
    %v109 = vld [vmem:[%s3 + $0x4] sm:$0xf]
    %v110 = vld [vmem:[%s3 + $0x8] sm:$0xf]
    %v111 = vld [vmem:[%s3 + $0xc] sm:$0xf]
    %v112 = vld [vmem:[%s3 + $0x10] sm:$0xf]
    %v113 = vld [vmem:[%s3 + $0x14] sm:$0xf]
    %v114 = vld [vmem:[%s3 + $0x18] sm:$0xf]
    %v115 = vld [vmem:[%s3 + $0x1c] sm:$0xf]
    %v116 = vld [vmem:[%s3 + $0x20] sm:$0xf]
    %v117 = vld [vmem:[%s3 + $0x24] sm:$0xf]
    %v118 = vld [vmem:[%s3 + $0x28] sm:$0xf]
    %v119 = vld [vmem:[%s3 + $0x2c] sm:$0xf]
    %v120 = vld [vmem:[%s3 + $0x30] sm:$0xf]
    %v121 = vld [vmem:[%s3 + $0x34] sm:$0xf]
    %v122 = vld [vmem:[%s3 + $0x38] sm:$0xf]
    %v123 = vld [vmem:[%s3 + $0x3c] sm:$0xf]
    %v124 = vld [vmem:[%s3 + $0x40] sm:$0xf]
    %v125 = vld [vmem:[%s3 + $0x44] sm:$0xf]
    %v126 = vld [vmem:[%s3 + $0x48] sm:$0xf]
    %v127 = vld [vmem:[%s3 + $0x4c] sm:$0xf]
    %v128 = vld [vmem:[%s3 + $0x50] sm:$0xf]
    %v129 = vld [vmem:[%s3 + $0x54] sm:$0xf]
    %v130 = vld [vmem:[%s3 + $0x58] sm:$0xf]
    %v131 = vld [vmem:[%s3 + $0x5c] sm:$0xf]
    %v132 = vld [vmem:[%s3 + $0x60] sm:$0xf]
    %v133 = vld [vmem:[%s3 + $0x64] sm:$0xf]
    %v134 = vld [vmem:[%s3 + $0x68] sm:$0xf]
    %v135 = vld [vmem:[%s3 + $0x6c] sm:$0xf]
    %v136 = vld [vmem:[%s3 + $0x70] sm:$0xf]
    %v137 = vld [vmem:[%s3 + $0x74] sm:$0xf]
    %v138 = vld [vmem:[%s3 + $0x78] sm:$0xf]
    %v139 = vld [vmem:[%s3 + $0x7c] sm:$0xf]
    %v140 = vld [vmem:[%s4] sm:$0x1]
    %v142 = vlaneseq
    %v143 = vshrl.u32 %v142, 7
    %v144 = vsub.s32 0, %v143
    %v145 = vrot.slane %v140, %v144
    %v179 = vunpack.c.l.b16 %v108
    %v180 = vunpack.c.l.b16 %v109
    %v181 = vunpack.c.l.b16 %v110
    %v182 = vunpack.c.l.b16 %v111
    %v183 = vunpack.c.l.b16 %v112
    %v184 = vunpack.c.l.b16 %v113
    %v185 = vunpack.c.l.b16 %v114
    %v186 = vunpack.c.l.b16 %v115
    %v187 = vunpack.c.l.b16 %v116
    %v188 = vunpack.c.l.b16 %v117
    %v189 = vunpack.c.l.b16 %v118
    %v190 = vunpack.c.l.b16 %v119
    %v191 = vunpack.c.l.b16 %v120
    %v192 = vunpack.c.l.b16 %v121
    %v193 = vunpack.c.l.b16 %v122
    %v194 = vunpack.c.l.b16 %v123
    %v195 = vunpack.c.l.b16 %v124
    %v196 = vunpack.c.l.b16 %v125
    %v197 = vunpack.c.l.b16 %v126
    %v198 = vunpack.c.l.b16 %v127
    %v199 = vunpack.c.l.b16 %v128
    %v200 = vunpack.c.l.b16 %v129
    %v201 = vunpack.c.l.b16 %v130
    %v202 = vunpack.c.l.b16 %v131
    %v203 = vunpack.c.l.b16 %v132
    %v204 = vunpack.c.l.b16 %v133
    %v205 = vunpack.c.l.b16 %v134
    %v206 = vunpack.c.l.b16 %v135
    %v207 = vunpack.c.l.b16 %v136
    %v208 = vunpack.c.l.b16 %v137
    %v209 = vunpack.c.l.b16 %v138
    %v210 = vunpack.c.l.b16 %v139
    %v211 = vpack.c.b16 %v180, %v179
    %v212 = vpack.c.b16 %v182, %v181
    %v213 = vpack.c.b16 %v184, %v183
    %v214 = vpack.c.b16 %v186, %v185
    %v215 = vpack.c.b16 %v188, %v187
    %v216 = vpack.c.b16 %v190, %v189
    %v217 = vpack.c.b16 %v192, %v191
    %v218 = vpack.c.b16 %v194, %v193
    %v219 = vpack.c.b16 %v196, %v195
    %v220 = vpack.c.b16 %v198, %v197
    %v221 = vpack.c.b16 %v200, %v199
    %v222 = vpack.c.b16 %v202, %v201
    %v223 = vpack.c.b16 %v204, %v203
    %v224 = vpack.c.b16 %v206, %v205
    %v225 = vpack.c.b16 %v208, %v207
    %v226 = vpack.c.b16 %v210, %v209
    %243 = vmatprep.subr.bf16.mxu0 0
    %244 = vmatpush1.bf16.msra.mxu0 %v218
    %245 = vmatprep.subr.bf16.mxu0 0
    %246 = vmatpush1.bf16.msra.mxu0 %v217
    %247 = vmatprep.subr.bf16.mxu0 0
    %248 = vmatpush1.bf16.msra.mxu0 %v216
    %249 = vmatprep.subr.bf16.mxu0 0
    %250 = vmatpush1.bf16.msra.mxu0 %v215
    %251 = vmatprep.subr.bf16.mxu0 0
    %252 = vmatpush1.bf16.msra.mxu0 %v214
    %253 = vmatprep.subr.bf16.mxu0 0
    %254 = vmatpush1.bf16.msra.mxu0 %v213
    %255 = vmatprep.subr.bf16.mxu0 0
    %256 = vmatpush1.bf16.msra.mxu0 %v212
    %257 = vmatprep.subr.bf16.mxu0 0
    %258 = vmatpush1.bf16.msra.mxu0 %v211
    %259 = vmatprep.subr.bf16.mxu0 0
    %260 = vmatpush2.bf16.msra.mxu0 %v226
    %261 = vmatprep.subr.bf16.mxu0 0
    %262 = vmatpush2.bf16.msra.mxu0 %v225
    %263 = vmatprep.subr.bf16.mxu0 0
    %264 = vmatpush2.bf16.msra.mxu0 %v224
    %265 = vmatprep.subr.bf16.mxu0 0
    %266 = vmatpush2.bf16.msra.mxu0 %v223
    %267 = vmatprep.subr.bf16.mxu0 0
    %268 = vmatpush2.bf16.msra.mxu0 %v222
    %269 = vmatprep.subr.bf16.mxu0 0
    %270 = vmatpush2.bf16.msra.mxu0 %v221
    %271 = vmatprep.subr.bf16.mxu0 0
    %272 = vmatpush2.bf16.msra.mxu0 %v220
    %273 = vmatprep.subr.bf16.mxu0 0
    %274 = vmatpush2.bf16.msra.mxu0 %v219
    %275 = vmatprep.mubr.bf16.mxu0 %v107
    %276 = vmatmul.mubr.bf16.gmra.mxu0 %v106
    %v277 = vpop.f32.mrf.mxu0
    %v278 = vadd.f32 %v145, %v277
    %v279 = vpop.f32.mrf.mxu0
    %v280 = vpop.f32.mrf.mxu0
    %v281 = vpop.f32.mrf.mxu0
    %282 = vdwg.mxu0
    %v283 = vunpack.c.l.bf16 %v22
    %v284 = vadd.f32 %v283, %v278
    %v285 = vmax.f32 %v284, 0.0
    %v286 = vpack.c.bf16 %v285, %v285
    %vm287 = vcmask 257024
    %288 = vst.msk [vmem:[#allocation2] sm:$0xf] %vm287, %v286
    // Predicated region
    $region22: #{tpu_custom_call.1} parent=1 // pred_check
      _
    $region23: #{tpu_custom_call.1} parent=1 // pred_check_branch
      %290 = sbr.rel (0) target = $region25
    $region24: #{tpu_custom_call.1} parent=1 // pred_region
      %s292 = ssub.s32 64, 64
      %293 = vsyncadd [#allocation3], %s292
      %s295 = sshll.u32 [#allocation2], 4
      %s296 = int_to_ptr.vmem [resolvable:$true] %s295
      %298 = dma.vmem_to_hbm [thread:$0]  %s296, 64, %s5, [#allocation3]
    $region25: #{tpu_custom_call.1} parent=1 // pred_fallthru
      _
    // Predicated region
    $region26: #{tpu_custom_call.1} parent=1 // pred_check
      _
    $region27: #{tpu_custom_call.1} parent=1 // pred_check_branch
      %300 = sbr.rel (0) target = $region29
    $region28: #{tpu_custom_call.1} parent=1 // pred_region
      %301 = dma.done [#allocation3], 64
    $region29: #{tpu_custom_call.1} parent=1 // pred_fallthru
      _
    %302 = vsyncpa [#allocation3], 1

</llo_original>
